<compile_context>
chip_gen: v7x
topology: tpu7x:2x2x1
jax: 0.10.0
libtpu: 0.0.40
codegen_flags: <defaults>
</compile_context>

<pallas_src>
import jax
import jax.numpy as jnp
from jax.experimental import pallas as pl
from jax.experimental.pallas import tpu as pltpu

_IN, _H, _OUT = 2, 3, 2          # real dims of the PyTorch module
_HP = 8                          # hidden features padded to sublane minimum
_OUTP = 8                        # output features padded to 8 (NOT 128)
_TILE_B = 4096                   # batch tile / single-block threshold


def _xor_mlp_kernel(x_ref, w1_ref, b1_ref, w2_ref, b2_ref, o_ref):
    # Layer 1: (tb, 2) @ (2, 8) + (1, 8) -> sigmoid.
    h = jnp.dot(x_ref[...], w1_ref[...], preferred_element_type=jnp.float32)
    h = jax.nn.sigmoid(h + b1_ref[...])
    # Layer 2: (tb, 8) @ (8, 8) + (1, 8) -> sigmoid.
    y = jnp.dot(h, w2_ref[...], preferred_element_type=jnp.float32)
    y = jax.nn.sigmoid(y + b2_ref[...])
    o_ref[...] = y.astype(o_ref.dtype)


def _pad_to(a, shape):
    pads = [(0, t - s) for s, t in zip(a.shape, shape)]
    return jnp.pad(a, pads)


def prepare_params(w1, b1, w2, b2):
    """Pad/transpose PyTorch-layout params ONCE (hoisted out of the forward path).

    w1: (3, 2), b1: (3,), w2: (2, 3), b2: (2,).
    """
    w1p = _pad_to(w1.T.astype(jnp.float32), (_IN, _HP))                 # (2, 8)
    b1p = _pad_to(b1.astype(jnp.float32).reshape(1, _H), (1, _HP))      # (1, 8)
    w2p = _pad_to(w2.T.astype(jnp.float32), (_HP, _OUTP))               # (8, 8)
    b2p = _pad_to(b2.astype(jnp.float32).reshape(1, _OUT), (1, _OUTP))  # (1, 8)
    return jax.device_put((w1p, b1p, w2p, b2p))


@jax.jit
def _forward_single_block(x, w1p, b1p, w2p, b2p):
    """B <= _TILE_B: single block, no grid / pipeline machinery, all VMEM-resident."""
    B = x.shape[0]
    vmem = pltpu.MemorySpace.VMEM
    return pl.pallas_call(
        _xor_mlp_kernel,
        out_shape=jax.ShapeDtypeStruct((B, _OUTP), jnp.float32),
        in_specs=[pl.BlockSpec(memory_space=vmem)] * 5,
        out_specs=pl.BlockSpec(memory_space=vmem),
    )(x, w1p, b1p, w2p, b2p)


@jax.jit
def _forward_tiled(x, w1p, b1p, w2p, b2p):
    """B > _TILE_B: tile the batch dim (>= 2 tiles guaranteed); weights stay resident."""
    B = x.shape[0]
    nb = pl.cdiv(B, _TILE_B)     # ragged last block is clipped by Pallas
    return pl.pallas_call(
        _xor_mlp_kernel,
        out_shape=jax.ShapeDtypeStruct((B, _OUTP), jnp.float32),
        grid=(nb,),
        in_specs=[
            pl.BlockSpec((_TILE_B, _IN), lambda i: (i, 0)),   # last dim == full array dim
            pl.BlockSpec((_IN, _HP), lambda i: (0, 0)),
            pl.BlockSpec((1, _HP), lambda i: (0, 0)),
            pl.BlockSpec((_HP, _OUTP), lambda i: (0, 0)),
            pl.BlockSpec((1, _OUTP), lambda i: (0, 0)),
        ],
        out_specs=pl.BlockSpec((_TILE_B, _OUTP), lambda i: (i, 0)),
        compiler_params=pltpu.CompilerParams(
            dimension_semantics=("parallel",)),
    )(x, w1p, b1p, w2p, b2p)


def xor_model_forward(x, padded_params):
    """x: (B, 2).  padded_params: output of prepare_params()."""
    w1p, b1p, w2p, b2p = padded_params
    x = jnp.asarray(x, jnp.float32)
    B = x.shape[0]
    if B <= _TILE_B:
        out = _forward_single_block(x, w1p, b1p, w2p, b2p)
    else:
        out = _forward_tiled(x, w1p, b1p, w2p, b2p)
    return out[:, :_OUT]


def init_params(key):
    """Deterministic init matching nn.Linear shapes: fc1 (3,2)+(3,), fc2 (2,3)+(2,)."""
    k1, k2, k3, k4 = jax.random.split(key, 4)
    lim1 = 1.0 / jnp.sqrt(2.0)   # mimic PyTorch uniform(-1/sqrt(fan_in), 1/sqrt(fan_in))
    lim2 = 1.0 / jnp.sqrt(3.0)
    w1 = jax.random.uniform(k1, (3, 2), jnp.float32, -lim1, lim1)
    b1 = jax.random.uniform(k2, (3,), jnp.float32, -lim1, lim1)
    w2 = jax.random.uniform(k3, (2, 3), jnp.float32, -lim2, lim2)
    b2 = jax.random.uniform(k4, (2,), jnp.float32, -lim2, lim2)
    return w1, b1, w2, b2


if __name__ == "__main__":
    key = jax.random.PRNGKey(0)
    w1, b1, w2, b2 = init_params(key)
    padded_params = prepare_params(w1, b1, w2, b2)

    def ref_fn(x):
        return jax.nn.sigmoid(jax.nn.sigmoid(x @ w1.T + b1) @ w2.T + b2)

    # 1) Classic XOR input set (batch=4, features=2) -> single-block path.
    x_small = jnp.array([[0.0, 0.0],
                         [0.0, 1.0],
                         [1.0, 0.0],
                         [1.0, 1.0]], dtype=jnp.float32)
    out_small = xor_model_forward(x_small, padded_params)
    jax.block_until_ready(out_small)
    assert out_small.shape == (4, 2)
    assert jnp.allclose(out_small, ref_fn(x_small), atol=1e-5)

    # 2) Batch > TILE_B with a ragged tail -> batch-tiled ("parallel") path, grid=2.
    x_big = jax.random.uniform(jax.random.PRNGKey(1), (6000, 2), jnp.float32)
    out_big = xor_model_forward(x_big, padded_params)
    jax.block_until_ready(out_big)
    assert out_big.shape == (6000, 2)
    assert jnp.allclose(out_big, ref_fn(x_big), atol=1e-4)

    print("KERNEL_OK")
</pallas_src>

<mosaic_0001>
module attributes {stable_mosaic.version = 11 : i64} {
  func.func @_xor_mlp_kernel(%arg0: memref<4x2xf32, #tpu.memory_space<vmem>>, %arg1: memref<2x8xf32, #tpu.memory_space<vmem>>, %arg2: memref<1x8xf32, #tpu.memory_space<vmem>>, %arg3: memref<8x8xf32, #tpu.memory_space<vmem>>, %arg4: memref<1x8xf32, #tpu.memory_space<vmem>>, %arg5: memref<4x8xf32, #tpu.memory_space<vmem>>) attributes {dimension_semantics = [], scalar_prefetch = 0 : i64, scratch_operands = 0 : i64, tpu.core_type = #tpu.core_type<tc>} {
    %c0 = arith.constant 0 : index
    %c0_0 = arith.constant 0 : index
    %0 = vector.load %arg0[%c0, %c0_0] : memref<4x2xf32, #tpu.memory_space<vmem>>, vector<4x2xf32>
    %c0_1 = arith.constant 0 : index
    %c0_2 = arith.constant 0 : index
    %1 = vector.load %arg1[%c0_1, %c0_2] : memref<2x8xf32, #tpu.memory_space<vmem>>, vector<2x8xf32>
    %cst = arith.constant dense<0.000000e+00> : vector<4x8xf32>
    %2 = tpu.matmul %0, %1, %cst {dimension_numbers = #tpu.dot_dimension_numbers<[1], [0], [0], [1], [0, 0, 1, 1], [], []>} : vector<4x2xf32>, vector<2x8xf32>, vector<4x8xf32> -> vector<4x8xf32>
    %c0_3 = arith.constant 0 : index
    %c0_4 = arith.constant 0 : index
    %3 = vector.load %arg2[%c0_3, %c0_4] : memref<1x8xf32, #tpu.memory_space<vmem>>, vector<1x8xf32>
    %4 = vector.broadcast %3 : vector<1x8xf32> to vector<4x8xf32>
    %5 = arith.addf %2, %4 : vector<4x8xf32>
    %6 = arith.negf %5 : vector<4x8xf32>
    %7 = math.exp %6 : vector<4x8xf32>
    %cst_5 = arith.constant 1.000000e+00 : f32
    %8 = vector.broadcast %cst_5 : f32 to vector<4x8xf32>
    %9 = arith.addf %8, %7 : vector<4x8xf32>
    %10 = arith.divf %8, %9 : vector<4x8xf32>
    %c0_6 = arith.constant 0 : index
    %c0_7 = arith.constant 0 : index
    %11 = vector.load %arg3[%c0_6, %c0_7] : memref<8x8xf32, #tpu.memory_space<vmem>>, vector<8x8xf32>
    %cst_8 = arith.constant dense<0.000000e+00> : vector<4x8xf32>
    %12 = tpu.matmul %10, %11, %cst_8 {dimension_numbers = #tpu.dot_dimension_numbers<[1], [0], [0], [1], [0, 0, 1, 1], [], []>} : vector<4x8xf32>, vector<8x8xf32>, vector<4x8xf32> -> vector<4x8xf32>
    %c0_9 = arith.constant 0 : index
    %c0_10 = arith.constant 0 : index
    %13 = vector.load %arg4[%c0_9, %c0_10] : memref<1x8xf32, #tpu.memory_space<vmem>>, vector<1x8xf32>
    %14 = vector.broadcast %13 : vector<1x8xf32> to vector<4x8xf32>
    %15 = arith.addf %12, %14 : vector<4x8xf32>
    %16 = arith.negf %15 : vector<4x8xf32>
    %17 = math.exp %16 : vector<4x8xf32>
    %cst_11 = arith.constant 1.000000e+00 : f32
    %18 = vector.broadcast %cst_11 : f32 to vector<4x8xf32>
    %19 = arith.addf %18, %17 : vector<4x8xf32>
    %20 = arith.divf %18, %19 : vector<4x8xf32>
    %c0_12 = arith.constant 0 : index
    %c0_13 = arith.constant 0 : index
    %21 = vector.load %arg5[%c0_12, %c0_13] : memref<4x8xf32, #tpu.memory_space<vmem>>, vector<4x8xf32>
    tpu.vector_store %arg5[%c0_12, %c0_13], %20 {strides = array<i32>} : memref<4x8xf32, #tpu.memory_space<vmem>>, vector<4x8xf32>,
    return
  }
}

</mosaic_0001>

<llo_original>
// kernel: _forward_single_block.1
$region0: #{_forward_single_block.1}
  #allocation0 [shape = 'u32[]', space=smem, size = 0x4, offset = 0x4, fixed_abs, tag = 'smem constant byte address 0x4 - core index']
  #allocation1 [shape = 'u32[144,128]{1,0:T(1,128)}', space=vmem, size = 0x12000, scoped, tag = 'internal scratch']
  %s0 = inlined_call_operand.vmem [shape: f32[4,2], index: 0, kind: input, shape index: {}]
  %s1 = inlined_call_operand.vmem [shape: f32[2,8], index: 1, kind: input, shape index: {}]
  %s2 = inlined_call_operand.vmem [shape: f32[1,8], index: 2, kind: input, shape index: {}]
  %s3 = inlined_call_operand.vmem [shape: f32[8,8], index: 3, kind: input, shape index: {}]
  %s4 = inlined_call_operand.vmem [shape: f32[1,8], index: 4, kind: input, shape index: {}]
  %s5 = inlined_call_operand.hbm [shape: f32[4,8], index: 5, kind: output, shape index: {}]
  %s6 = sld [smem:[#allocation0]]
  $region30: #{_forward_single_block.1} parent=0
    _
  %s8 = ssub.s32 1, %s6
  %s9 = scalar_select 0, %s8, %s6
  $region1: #{_forward_single_block.1} parent=0
    #allocation2 [shape = 'u8[2048]{0}', space=vmem, size = 0x800, scoped, tag = 'output window, operand 0, single buffered']
    #allocation3 [shape = 's32[1]{0}', space=sflag, size = 0x4, scoped, tag = 'scoped memory for _forward_single_block.1']
    %10 = vsyncpa [#allocation3], 0
    // Predicated region
    $region2: #{_forward_single_block.1} parent=1 // pred_check
      _
    $region3: #{_forward_single_block.1} parent=1 // pred_check_branch
      %12 = sbr.rel (0) target = $region5
    $region4: #{_forward_single_block.1} parent=1 // pred_region
      _
    $region5: #{_forward_single_block.1} parent=1 // pred_fallthru
      _
    // Predicated region
    $region6: #{_forward_single_block.1} parent=1 // pred_check
      _
    $region7: #{_forward_single_block.1} parent=1 // pred_check_branch
      %14 = sbr.rel (0) target = $region9
    $region8: #{_forward_single_block.1} parent=1 // pred_region
      _
    $region9: #{_forward_single_block.1} parent=1 // pred_fallthru
      _
    // Predicated region
    $region10: #{_forward_single_block.1} parent=1 // pred_check
      _
    $region11: #{_forward_single_block.1} parent=1 // pred_check_branch
      %16 = sbr.rel (0) target = $region13
    $region12: #{_forward_single_block.1} parent=1 // pred_region
      _
    $region13: #{_forward_single_block.1} parent=1 // pred_fallthru
      _
    // Predicated region
    $region14: #{_forward_single_block.1} parent=1 // pred_check
      _
    $region15: #{_forward_single_block.1} parent=1 // pred_check_branch
      %18 = sbr.rel (0) target = $region17
    $region16: #{_forward_single_block.1} parent=1 // pred_region
      _
    $region17: #{_forward_single_block.1} parent=1 // pred_fallthru
      _
    // Predicated region
    $region18: #{_forward_single_block.1} parent=1 // pred_check
      _
    $region19: #{_forward_single_block.1} parent=1 // pred_check_branch
      %20 = sbr.rel (0) target = $region21
    $region20: #{_forward_single_block.1} parent=1 // pred_region
      _
    $region21: #{_forward_single_block.1} parent=1 // pred_fallthru
      _
    %v21 = vld [vmem:[%s0] sm:$0xf]
    %v22 = vld [vmem:[%s1] sm:$0x3]
    %v23 = vld [vmem:[%s2] sm:$0x1]
    %v25 = vlaneseq
    %v26 = vshrl.u32 %v25, 7
    %v27 = vsub.s32 0, %v26
    %v28 = vrot.slane %v23, %v27
    %vm30 = vcmask 15360
    %v32 = vsel %vm30, %v21, 0
    %vm34 = vcmask 1041408
    %v36 = vsel %vm34, %v22, 0
    %38 = vmatprep.subr.mxu0 0.0
    %39 = vmatpush1.msra.mxu0 %v36
    %40 = vmatprep.subr.mxu0 0.0
    %41 = vmatpush1.msra.mxu0 0.0
    %42 = vmatprep.subr.mxu0 0.0
    %43 = vmatpush1.msra.mxu0 0.0
    %44 = vmatprep.subr.mxu0 0.0
    %45 = vmatpush1.msra.mxu0 0.0
    %46 = vmatprep.subr.mxu0 0.0
    %47 = vmatpush1.msra.mxu0 0.0
    %48 = vmatprep.subr.mxu0 0.0
    %49 = vmatpush1.msra.mxu0 0.0
    %50 = vmatprep.subr.mxu0 0.0
    %51 = vmatpush1.msra.mxu0 0.0
    %52 = vmatprep.subr.mxu0 0.0
    %53 = vmatpush1.msra.mxu0 0.0
    %54 = vmatprep.subr.mxu0 0.0
    %55 = vmatpush1.msra.mxu0 0.0
    %56 = vmatprep.subr.mxu0 0.0
    %57 = vmatpush1.msra.mxu0 0.0
    %58 = vmatprep.subr.mxu0 0.0
    %59 = vmatpush1.msra.mxu0 0.0
    %60 = vmatprep.subr.mxu0 0.0
    %61 = vmatpush1.msra.mxu0 0.0
    %62 = vmatprep.subr.mxu0 0.0
    %63 = vmatpush1.msra.mxu0 0.0
    %64 = vmatprep.subr.mxu0 0.0
    %65 = vmatpush1.msra.mxu0 0.0
    %66 = vmatprep.subr.mxu0 0.0
    %67 = vmatpush1.msra.mxu0 0.0
    %68 = vmatprep.subr.mxu0 0.0
    %69 = vmatpush1.msra.mxu0 0.0
    %70 = vmatprep.subr.mxu0 0.0
    %71 = vmatpush1.msra.mxu0 0.0
    %72 = vmatprep.subr.mxu0 0.0
    %73 = vmatpush1.msra.mxu0 0.0
    %74 = vmatprep.subr.mxu0 0.0
    %75 = vmatpush1.msra.mxu0 0.0
    %76 = vmatprep.subr.mxu0 0.0
    %77 = vmatpush1.msra.mxu0 0.0
    %78 = vmatprep.subr.mxu0 0.0
    %79 = vmatpush1.msra.mxu0 0.0
    %80 = vmatprep.subr.mxu0 0.0
    %81 = vmatpush1.msra.mxu0 0.0
    %82 = vmatprep.subr.mxu0 0.0
    %83 = vmatpush1.msra.mxu0 0.0
    %84 = vmatprep.subr.mxu0 0.0
    %85 = vmatpush1.msra.mxu0 0.0
    %86 = vmatprep.subr.mxu0 0.0
    %87 = vmatpush1.msra.mxu0 0.0
    %88 = vmatprep.subr.mxu0 0.0
    %89 = vmatpush1.msra.mxu0 0.0
    %90 = vmatprep.subr.mxu0 0.0
    %91 = vmatpush1.msra.mxu0 0.0
    %92 = vmatprep.subr.mxu0 0.0
    %93 = vmatpush1.msra.mxu0 0.0
    %94 = vmatprep.subr.mxu0 0.0
    %95 = vmatpush1.msra.mxu0 0.0
    %96 = vmatprep.subr.mxu0 0.0
    %97 = vmatpush1.msra.mxu0 0.0
    %98 = vmatprep.subr.mxu0 0.0
    %99 = vmatpush1.msra.mxu0 0.0
    %100 = vmatprep.subr.mxu0 0.0
    %101 = vmatpush1.msra.mxu0 0.0
    %102 = vmatprep.mubr.f32.mxu0 0.0
    %103 = vmatmul.mubr.f32.gmra.mrb[0].mxu0 %v32
    %v104 = vpop.f32.mrb[0].mxu0
    %v105 = vadd.f32 %v28, %v104
    %v106 = vpop.f32.mrb[0].mxu0
    %107 = vdwg.mxu0
    %v108 = vxor.u32 %v105, 2147483648
    %v109 = vmul.f32 %v108, 1.442695
    %v110 = vpow.pop %v109
    %v111 = vadd.f32 %v110, 1.0
    %v112 = vrcp.pop %v111
    %v113 = vmul.f32 1.0, %v112
    %v114 = vld [vmem:[%s3] sm:$0xff]
    %v115 = vld [vmem:[%s4] sm:$0x1]
    %v117 = vlaneseq
    %v118 = vshrl.u32 %v117, 7
    %v119 = vsub.s32 0, %v118
    %v120 = vrot.slane %v115, %v119
    %vm122 = vcmask 64512
    %v124 = vsel %vm122, %v113, 0
    %126 = vmatprep.subr.mxu0 0.0
    %127 = vmatpush1.msra.mxu0 %v114
    %128 = vmatprep.subr.mxu0 0.0
    %129 = vmatpush1.msra.mxu0 0.0
    %130 = vmatprep.subr.mxu0 0.0
    %131 = vmatpush1.msra.mxu0 0.0
    %132 = vmatprep.subr.mxu0 0.0
    %133 = vmatpush1.msra.mxu0 0.0
    %134 = vmatprep.subr.mxu0 0.0
    %135 = vmatpush1.msra.mxu0 0.0
    %136 = vmatprep.subr.mxu0 0.0
    %137 = vmatpush1.msra.mxu0 0.0
    %138 = vmatprep.subr.mxu0 0.0
    %139 = vmatpush1.msra.mxu0 0.0
    %140 = vmatprep.subr.mxu0 0.0
    %141 = vmatpush1.msra.mxu0 0.0
    %142 = vmatprep.subr.mxu0 0.0
    %143 = vmatpush1.msra.mxu0 0.0
    %144 = vmatprep.subr.mxu0 0.0
    %145 = vmatpush1.msra.mxu0 0.0
    %146 = vmatprep.subr.mxu0 0.0
    %147 = vmatpush1.msra.mxu0 0.0
    %148 = vmatprep.subr.mxu0 0.0
    %149 = vmatpush1.msra.mxu0 0.0
    %150 = vmatprep.subr.mxu0 0.0
    %151 = vmatpush1.msra.mxu0 0.0
    %152 = vmatprep.subr.mxu0 0.0
    %153 = vmatpush1.msra.mxu0 0.0
    %154 = vmatprep.subr.mxu0 0.0
    %155 = vmatpush1.msra.mxu0 0.0
    %156 = vmatprep.subr.mxu0 0.0
    %157 = vmatpush1.msra.mxu0 0.0
    %158 = vmatprep.subr.mxu0 0.0
    %159 = vmatpush1.msra.mxu0 0.0
    %160 = vmatprep.subr.mxu0 0.0
    %161 = vmatpush1.msra.mxu0 0.0
    %162 = vmatprep.subr.mxu0 0.0
    %163 = vmatpush1.msra.mxu0 0.0
    %164 = vmatprep.subr.mxu0 0.0
    %165 = vmatpush1.msra.mxu0 0.0
    %166 = vmatprep.subr.mxu0 0.0
    %167 = vmatpush1.msra.mxu0 0.0
    %168 = vmatprep.subr.mxu0 0.0
    %169 = vmatpush1.msra.mxu0 0.0
    %170 = vmatprep.subr.mxu0 0.0
    %171 = vmatpush1.msra.mxu0 0.0
    %172 = vmatprep.subr.mxu0 0.0
    %173 = vmatpush1.msra.mxu0 0.0
    %174 = vmatprep.subr.mxu0 0.0
    %175 = vmatpush1.msra.mxu0 0.0
    %176 = vmatprep.subr.mxu0 0.0
    %177 = vmatpush1.msra.mxu0 0.0
    %178 = vmatprep.subr.mxu0 0.0
    %179 = vmatpush1.msra.mxu0 0.0
    %180 = vmatprep.subr.mxu0 0.0
    %181 = vmatpush1.msra.mxu0 0.0
    %182 = vmatprep.subr.mxu0 0.0
    %183 = vmatpush1.msra.mxu0 0.0
    %184 = vmatprep.subr.mxu0 0.0
    %185 = vmatpush1.msra.mxu0 0.0
    %186 = vmatprep.subr.mxu0 0.0
    %187 = vmatpush1.msra.mxu0 0.0
    %188 = vmatprep.subr.mxu0 0.0
    %189 = vmatpush1.msra.mxu0 0.0
    %190 = vmatprep.mubr.f32.mxu0 0.0
    %191 = vmatmul.mubr.f32.gmra.mrb[0].mxu0 %v124
    %v192 = vpop.f32.mrb[0].mxu0
    %v193 = vadd.f32 %v120, %v192
    %v194 = vpop.f32.mrb[0].mxu0
    %195 = vdwg.mxu0
    %v196 = vxor.u32 %v193, 2147483648
    %v197 = vmul.f32 %v196, 1.442695
    %v198 = vpow.pop %v197
    %v199 = vadd.f32 %v198, 1.0
    %v200 = vrcp.pop %v199
    %v201 = vmul.f32 1.0, %v200
    %vm202 = vcmask 60416
    %203 = vst.msk [vmem:[#allocation2] sm:$0xf] %vm202, %v201
    // Predicated region
    $region22: #{_forward_single_block.1} parent=1 // pred_check
      _
    $region23: #{_forward_single_block.1} parent=1 // pred_check_branch
      %205 = sbr.rel (0) target = $region25
    $region24: #{_forward_single_block.1} parent=1 // pred_region
      %s207 = ssub.s32 64, 64
      %208 = vsyncadd [#allocation3], %s207
      %s210 = sshll.u32 [#allocation2], 4
      %s211 = int_to_ptr.vmem [resolvable:$true] %s210
      %213 = dma.vmem_to_hbm [thread:$0]  %s211, 64, %s5, [#allocation3]
    $region25: #{_forward_single_block.1} parent=1 // pred_fallthru
      _
    // Predicated region
    $region26: #{_forward_single_block.1} parent=1 // pred_check
      _
    $region27: #{_forward_single_block.1} parent=1 // pred_check_branch
      %215 = sbr.rel (0) target = $region29
    $region28: #{_forward_single_block.1} parent=1 // pred_region
      %216 = dma.done [#allocation3], 64
    $region29: #{_forward_single_block.1} parent=1 // pred_fallthru
      _
    %217 = vsyncpa [#allocation3], 1

</llo_original>
